<compile_context>
chip_gen: v6e
topology: v6e:2x2x1
jax: 0.10.0
libtpu: 0.0.40
codegen_flags: <defaults>
</compile_context>

<pallas_src>
import numpy as np
import jax
import jax.numpy as jnp
from jax.experimental import pallas as pl
from jax.experimental.pallas import tpu as pltpu


def _fused_ddpm_kernel(coef_ref,           # (T, 4) f32, SMEM  : per-step coefficients
                       x0_ref,             # (C, tile_m) f32   : x_T slab (read at t==0)
                       noise_ref,          # (1, C, tile_m) f32: this step's noise
                       w1t_ref, b1t_ref,   # (hidden, C), (hidden, 1)
                       w2t_ref, b2t_ref,   # (C, hidden), (C, 1)
                       out_ref):           # (C, tile_m) f32   : resident carry / result
    t = pl.program_id(1)

    # Initialize the resident carry from x_T on the first timestep of this M-tile.
    @pl.when(t == 0)
    def _():
        out_ref[...] = x0_ref[...]

    x = out_ref[...]                                       # (C, tile_m), stays in VMEM

    # Synthetic eps model: two 1x1 convs (channel mixing) with tanh, channels-first so
    # the matmul output dim (tile_m) and all elementwise work are lane-dense.  tanh
    # lowers to the EUP (its own bundle slot), so it overlaps the VALU/MXU work.
    h = jnp.tanh(jnp.dot(w1t_ref[...], x, preferred_element_type=jnp.float32)
                 + b1t_ref[...])
    eps = jnp.dot(w2t_ref[...], h, preferred_element_type=jnp.float32) + b2t_ref[...]

    rcp_a_ts = coef_ref[t, 0]          # 1 / a_ts
    beta_over_sigma = coef_ref[t, 1]   # beta_ts / sigma_t
    sqrt_var = coef_ref[t, 2]          # sqrt(exp(posterior_log_var_clipped[t]))

    # DDPM posterior: x_prev = 1/a_ts * (x - eps*beta_ts/sigma_t) + sqrt(var)*noise
    mean = rcp_a_ts * (x - eps * beta_over_sigma)
    out_ref[...] = mean + sqrt_var * noise_ref[0]


def _build_forward_fn(T, C, M, hidden, tile_m, num_m, N, H, W):
    grid_spec = pltpu.PrefetchScalarGridSpec(
        num_scalar_prefetch=0,
        grid=(num_m, T),                                   # T last: the carry axis
        in_specs=[
            pl.BlockSpec(memory_space=pltpu.MemorySpace.SMEM),      # (T, 4) coef table
            pl.BlockSpec((C, tile_m), lambda m, t: (0, m)),         # x_T slab
            pl.BlockSpec((1, C, tile_m), lambda m, t: (t, 0, m)),   # noise[t]
            pl.BlockSpec((hidden, C), lambda m, t: (0, 0)),         # w1^T (resident)
            pl.BlockSpec((hidden, 1), lambda m, t: (0, 0)),         # b1^T (resident)
            pl.BlockSpec((C, hidden), lambda m, t: (0, 0)),         # w2^T (resident)
            pl.BlockSpec((C, 1), lambda m, t: (0, 0)),              # b2^T (resident)
        ],
        out_specs=pl.BlockSpec((C, tile_m), lambda m, t: (0, m)),   # constant over T
    )
    sampler_call = pl.pallas_call(
        _fused_ddpm_kernel,
        out_shape=jax.ShapeDtypeStruct((C, M), jnp.float32),
        grid_spec=grid_spec,
        compiler_params=pltpu.CompilerParams(
            dimension_semantics=("parallel", "arbitrary")),
    )

    def fwd(x_T, rng, coefs, w1t, b1t, w2t, b2t):
        # NCHW -> channels-first lane-dense slab (C, M), M = N*H*W
        x = jnp.transpose(x_T, (1, 0, 2, 3)).reshape(C, M).astype(jnp.float32)
        # All T steps of noise in one dispatch; streamed by the noise BlockSpec.
        noise = jax.random.normal(rng, (T, C, M), dtype=jnp.float32)
        x_prev = sampler_call(coefs, x, noise, w1t, b1t, w2t, b2t)
        x0 = jnp.transpose(x_prev.reshape(C, N, H, W), (1, 0, 2, 3))
        return jnp.clip(x0, -1.0, 1.0)

    return jax.jit(fwd)


class GaussianDiffusionSamplerDDPM:
    """JAX/Pallas port of GaussianDiffusionSamplergm.forward (sample_type='ddpm')."""

    def __init__(self, beta_1, beta_T, T, img_size=16, channels=4, hidden=32):
        # TODO(synk): the 'gmddpm' branch depends on solve_gmm (undefined in the source)
        # and 'analyticdpm' needs a cov_model; only the fully specified 'ddpm' path is ported.
        self.T = T
        self.total_T = 1000
        if self.total_T % self.T == 0:
            self.ratio = int(self.total_T / self.T)
        else:
            self.ratio = int(self.total_T / self.T) + 1
        self.t_list = [max(self.total_T - 1 - self.ratio * x, 1) for x in range(T)]
        self.img_size = img_size
        self.channels = channels
        self.hidden = hidden

        # --- beta schedule buffers (float64, mirrors the torch .double() buffers) ---
        betas = np.linspace(beta_1, beta_T, self.total_T, dtype=np.float64)
        alphas = 1.0 - betas
        alphas_bar = np.cumprod(alphas)
        alphas_bar_prev = np.concatenate([[1.0], alphas_bar[:-1]])
        one_minus_alphas_bar = 1.0 - alphas_bar
        sqrt_recip_alphas_bar = np.sqrt(1.0 / alphas_bar)
        posterior_var = betas * (1.0 - alphas_bar_prev) / (1.0 - alphas_bar)
        posterior_log_var_clipped = np.log(
            np.concatenate([posterior_var[1:2], posterior_var[1:]]))

        # --- per-timestep scalar coefficients (extract() casts to float32 first) ---
        coefs = []
        for t in self.t_list:
            s = t - self.ratio if (t - self.ratio) >= 0 else 0
            sra_s = np.float32(sqrt_recip_alphas_bar[s])
            sra_t = np.float32(sqrt_recip_alphas_bar[t])
            a_ts = sra_s / sra_t
            sigma_s = np.sqrt(np.float32(one_minus_alphas_bar[s]))
            sigma_t = np.sqrt(np.float32(one_minus_alphas_bar[t]))
            beta_ts = sigma_t * sigma_t - a_ts * a_ts * sigma_s * sigma_s
            var = np.exp(np.float32(posterior_log_var_clipped[t]))
            coefs.append([np.float32(1.0) / a_ts,
                          beta_ts / sigma_t,
                          np.sqrt(var),
                          np.float32(0.0)])
        # Device-resident once: no per-step host->device coefficient transfers.
        self.coefs = jnp.asarray(np.asarray(coefs, dtype=np.float32))       # (T, 4)

        # --- deterministic synthetic eps-model weights (1x1-conv channel MLP),
        #     stored transposed for the channels-first (C, M) layout ---
        wkey = jax.random.PRNGKey(42)
        k1, k2, k3, k4 = jax.random.split(wkey, 4)
        w1 = jax.random.normal(k1, (channels, hidden), jnp.float32) * 0.1
        b1 = jax.random.normal(k2, (1, hidden), jnp.float32) * 0.01
        w2 = jax.random.normal(k3, (hidden, channels), jnp.float32) * 0.1
        b2 = jax.random.normal(k4, (1, channels), jnp.float32) * 0.01
        self.w1t = jnp.transpose(w1)   # (hidden, C)
        self.b1t = jnp.transpose(b1)   # (hidden, 1)
        self.w2t = jnp.transpose(w2)   # (C, hidden)
        self.b2t = jnp.transpose(b2)   # (C, 1)

        self._fns = {}                 # compiled forward fns keyed by (N, C, H, W)

    @staticmethod
    def _choose_m_tiling(M):
        """Lane-dense M tiling: prefer >=2 tiles (feeds both v7x TensorCores via the
        'parallel' axis) and cap the tile size so per-tile VMEM stays small everywhere."""
        num_m = 1
        if M % 256 == 0:
            num_m = 2
            while (M // num_m) > 4096 and M % (num_m * 2) == 0 and (M // (num_m * 2)) % 128 == 0:
                num_m *= 2
        return M // num_m, num_m

    def __call__(self, x_T, rng):
        N, C, H, W = x_T.shape
        assert C == self.channels
        M = N * H * W
        key = (N, C, H, W)
        if key not in self._fns:                      # cache keyed on full input shape
            tile_m, num_m = self._choose_m_tiling(M)
            self._fns[key] = _build_forward_fn(
                self.T, C, M, self.hidden, tile_m, num_m, N, H, W)
        return self._fns[key](x_T, rng, self.coefs,
                              self.w1t, self.b1t, self.w2t, self.b2t)

    def reference_forward(self, x_T, rng):
        """Pure-JAX (non-Pallas) reference using the same noise, for self-checking."""
        N, C, H, W = x_T.shape
        M = N * H * W
        x = jnp.transpose(x_T, (1, 0, 2, 3)).reshape(C, M).astype(jnp.float32)
        noise = jax.random.normal(rng, (self.T, C, M), dtype=jnp.float32)
        hi = jax.lax.Precision.HIGHEST
        for i in range(self.T):
            h = jnp.tanh(jnp.dot(self.w1t, x, precision=hi) + self.b1t)
            eps = jnp.dot(self.w2t, h, precision=hi) + self.b2t
            c = self.coefs[i]
            x = c[0] * (x - eps * c[1]) + c[2] * noise[i]
        x0 = jnp.transpose(x.reshape(C, N, H, W), (1, 0, 2, 3))
        return jnp.clip(x0, -1.0, 1.0)


if __name__ == "__main__":
    key = jax.random.PRNGKey(0)
    k_x, k_noise = jax.random.split(key)

    N, C, H, W = 2, 4, 16, 16
    x_T = jax.random.normal(k_x, (N, C, H, W), dtype=jnp.float32)

    sampler = GaussianDiffusionSamplerDDPM(
        beta_1=1e-4, beta_T=0.02, T=8, img_size=H, channels=C, hidden=32)

    x_0 = sampler(x_T, k_noise)
    x_0 = jax.block_until_ready(x_0)

    assert x_0.shape == (N, C, H, W)
    assert bool(jnp.all(jnp.isfinite(x_0)))
    assert bool(jnp.all(x_0 <= 1.0)) and bool(jnp.all(x_0 >= -1.0))

    # Structural cross-check against the pure-JAX reference.  The check is a robust
    # mismatch-fraction (not element-wise allclose) so it tolerates matmul-precision
    # differences between XLA and the MXU while still catching coefficient-indexing,
    # carry or layout bugs (which flip a large fraction of clipped pixels).
    x_ref = jax.block_until_ready(sampler.reference_forward(x_T, k_noise))
    diff = np.abs(np.asarray(x_0) - np.asarray(x_ref))
    mismatch_frac = float(np.mean(diff > 0.1))
    assert mismatch_frac < 0.02, f"kernel/reference mismatch fraction {mismatch_frac}"

    print("KERNEL_OK")
</pallas_src>

<mosaic_0001>
module attributes {stable_mosaic.version = 11 : i64} {
  func.func @_fused_ddpm_kernel(%arg0: i32, %arg1: i32, %arg2: memref<8x4xf32, #tpu.memory_space<smem>>, %arg3: memref<4x256xf32, #tpu.memory_space<vmem>>, %arg4: memref<1x4x256xf32, #tpu.memory_space<vmem>>, %arg5: memref<32x4xf32, #tpu.memory_space<vmem>>, %arg6: memref<32x1xf32, #tpu.memory_space<vmem>>, %arg7: memref<4x32xf32, #tpu.memory_space<vmem>>, %arg8: memref<4x1xf32, #tpu.memory_space<vmem>>, %arg9: memref<4x256xf32, #tpu.memory_space<vmem>>) attributes {dimension_semantics = [#tpu.dimension_semantics<parallel>, #tpu.dimension_semantics<arbitrary>], iteration_bounds = array<i64: 2, 8>, scalar_prefetch = 0 : i64, scratch_operands = 0 : i64, tpu.core_type = #tpu.core_type<tc>, window_params = [{transform_indices = @transform_0, window_bounds = array<i64: 8, 4>}, {transform_indices = @transform_1, window_bounds = array<i64: 4, 256>}, {transform_indices = @transform_2, window_bounds = array<i64: 1, 4, 256>}, {pipeline_mode = #tpu.pipeline_mode<synchronous>, transform_indices = @transform_3, window_bounds = array<i64: 32, 4>}, {pipeline_mode = #tpu.pipeline_mode<synchronous>, transform_indices = @transform_4, window_bounds = array<i64: 32, 1>}, {pipeline_mode = #tpu.pipeline_mode<synchronous>, transform_indices = @transform_5, window_bounds = array<i64: 4, 32>}, {pipeline_mode = #tpu.pipeline_mode<synchronous>, transform_indices = @transform_6, window_bounds = array<i64: 4, 1>}, {transform_indices = @transform_7, window_bounds = array<i64: 4, 256>}]} {
    %c0_i32 = arith.constant 0 : i32
    %0 = arith.cmpi eq, %arg1, %c0_i32 : i32
    %1 = arith.extui %0 : i1 to i32
    %c0_i32_0 = arith.constant 0 : i32
    %2 = arith.cmpi ne, %1, %c0_i32_0 : i32
    scf.if %2 {
      %c0_17 = arith.constant 0 : index
      %c0_18 = arith.constant 0 : index
      %32 = vector.load %arg3[%c0_17, %c0_18] : memref<4x256xf32, #tpu.memory_space<vmem>>, vector<4x256xf32>
      %c0_19 = arith.constant 0 : index
      %c0_20 = arith.constant 0 : index
      %33 = vector.load %arg9[%c0_19, %c0_20] : memref<4x256xf32, #tpu.memory_space<vmem>>, vector<4x256xf32>
      tpu.vector_store %arg9[%c0_19, %c0_20], %32 {strides = array<i32>} : memref<4x256xf32, #tpu.memory_space<vmem>>, vector<4x256xf32>,
    } else {
    }
    %c0 = arith.constant 0 : index
    %c0_1 = arith.constant 0 : index
    %3 = vector.load %arg9[%c0, %c0_1] : memref<4x256xf32, #tpu.memory_space<vmem>>, vector<4x256xf32>
    %c0_2 = arith.constant 0 : index
    %c0_3 = arith.constant 0 : index
    %4 = vector.load %arg5[%c0_2, %c0_3] : memref<32x4xf32, #tpu.memory_space<vmem>>, vector<32x4xf32>
    %cst = arith.constant dense<0.000000e+00> : vector<32x256xf32>
    %5 = tpu.matmul %4, %3, %cst {dimension_numbers = #tpu.dot_dimension_numbers<[1], [0], [0], [1], [0, 0, 1, 1], [], []>} : vector<32x4xf32>, vector<4x256xf32>, vector<32x256xf32> -> vector<32x256xf32>
    %c0_4 = arith.constant 0 : index
    %c0_5 = arith.constant 0 : index
    %6 = vector.load %arg6[%c0_4, %c0_5] : memref<32x1xf32, #tpu.memory_space<vmem>>, vector<32x1xf32>
    %7 = vector.broadcast %6 : vector<32x1xf32> to vector<32x256xf32>
    %8 = arith.addf %5, %7 : vector<32x256xf32>
    %9 = math.tanh %8 : vector<32x256xf32>
    %c0_6 = arith.constant 0 : index
    %c0_7 = arith.constant 0 : index
    %10 = vector.load %arg7[%c0_6, %c0_7] : memref<4x32xf32, #tpu.memory_space<vmem>>, vector<4x32xf32>
    %cst_8 = arith.constant dense<0.000000e+00> : vector<4x256xf32>
    %11 = tpu.matmul %10, %9, %cst_8 {dimension_numbers = #tpu.dot_dimension_numbers<[1], [0], [0], [1], [0, 0, 1, 1], [], []>} : vector<4x32xf32>, vector<32x256xf32>, vector<4x256xf32> -> vector<4x256xf32>
    %c0_9 = arith.constant 0 : index
    %c0_10 = arith.constant 0 : index
    %12 = vector.load %arg8[%c0_9, %c0_10] : memref<4x1xf32, #tpu.memory_space<vmem>>, vector<4x1xf32>
    %13 = vector.broadcast %12 : vector<4x1xf32> to vector<4x256xf32>
    %14 = arith.addf %11, %13 : vector<4x256xf32>
    %15 = arith.index_cast %arg1 : i32 to index
    %c0_11 = arith.constant 0 : index
    %16 = memref.load %arg2[%15, %c0_11] : memref<8x4xf32, #tpu.memory_space<smem>>
    %17 = arith.index_cast %arg1 : i32 to index
    %c1 = arith.constant 1 : index
    %18 = memref.load %arg2[%17, %c1] : memref<8x4xf32, #tpu.memory_space<smem>>
    %19 = arith.index_cast %arg1 : i32 to index
    %c2 = arith.constant 2 : index
    %20 = memref.load %arg2[%19, %c2] : memref<8x4xf32, #tpu.memory_space<smem>>
    %21 = vector.broadcast %18 : f32 to vector<4x256xf32>
    %22 = arith.mulf %14, %21 : vector<4x256xf32>
    %23 = arith.subf %3, %22 : vector<4x256xf32>
    %24 = vector.broadcast %16 : f32 to vector<4x256xf32>
    %25 = arith.mulf %24, %23 : vector<4x256xf32>
    %c0_12 = arith.constant 0 : index
    %c0_13 = arith.constant 0 : index
    %c0_14 = arith.constant 0 : index
    %26 = vector.load %arg4[%c0_12, %c0_13, %c0_14] : memref<1x4x256xf32, #tpu.memory_space<vmem>>, vector<1x4x256xf32>
    %27 = vector.shape_cast %26 : vector<1x4x256xf32> to vector<4x256xf32>
    %28 = vector.broadcast %20 : f32 to vector<4x256xf32>
    %29 = arith.mulf %28, %27 : vector<4x256xf32>
    %30 = arith.addf %25, %29 : vector<4x256xf32>
    %c0_15 = arith.constant 0 : index
    %c0_16 = arith.constant 0 : index
    %31 = vector.load %arg9[%c0_15, %c0_16] : memref<4x256xf32, #tpu.memory_space<vmem>>, vector<4x256xf32>
    tpu.vector_store %arg9[%c0_15, %c0_16], %30 {strides = array<i32>} : memref<4x256xf32, #tpu.memory_space<vmem>>, vector<4x256xf32>,
    return
  }
  func.func @transform_0(%arg0: i32, %arg1: i32) -> (i32, i32) {
    %c0_i32 = arith.constant 0 : i32
    %c0_i32_0 = arith.constant 0 : i32
    %c0_i32_1 = arith.constant 0 : i32
    return %c0_i32, %c0_i32_0 : i32, i32
  }
  func.func @transform_1(%arg0: i32, %arg1: i32) -> (i32, i32) {
    %c0_i32 = arith.constant 0 : i32
    %c0_i32_0 = arith.constant 0 : i32
    return %c0_i32, %arg0 : i32, i32
  }
  func.func @transform_2(%arg0: i32, %arg1: i32) -> (i32, i32, i32) {
    %c0_i32 = arith.constant 0 : i32
    %c0_i32_0 = arith.constant 0 : i32
    return %arg1, %c0_i32, %arg0 : i32, i32, i32
  }
  func.func @transform_3(%arg0: i32, %arg1: i32) -> (i32, i32) {
    %c0_i32 = arith.constant 0 : i32
    %c0_i32_0 = arith.constant 0 : i32
    %c0_i32_1 = arith.constant 0 : i32
    return %c0_i32, %c0_i32_0 : i32, i32
  }
  func.func @transform_4(%arg0: i32, %arg1: i32) -> (i32, i32) {
    %c0_i32 = arith.constant 0 : i32
    %c0_i32_0 = arith.constant 0 : i32
    %c0_i32_1 = arith.constant 0 : i32
    return %c0_i32, %c0_i32_0 : i32, i32
  }
  func.func @transform_5(%arg0: i32, %arg1: i32) -> (i32, i32) {
    %c0_i32 = arith.constant 0 : i32
    %c0_i32_0 = arith.constant 0 : i32
    %c0_i32_1 = arith.constant 0 : i32
    return %c0_i32, %c0_i32_0 : i32, i32
  }
  func.func @transform_6(%arg0: i32, %arg1: i32) -> (i32, i32) {
    %c0_i32 = arith.constant 0 : i32
    %c0_i32_0 = arith.constant 0 : i32
    %c0_i32_1 = arith.constant 0 : i32
    return %c0_i32, %c0_i32_0 : i32, i32
  }
  func.func @transform_7(%arg0: i32, %arg1: i32) -> (i32, i32) {
    %c0_i32 = arith.constant 0 : i32
    %c0_i32_0 = arith.constant 0 : i32
    return %c0_i32, %arg0 : i32, i32
  }
}

</mosaic_0001>

<llo_original>
// kernel: fwd.1
$region0: #{fwd.1}
  #allocation0 [shape = 'u32[]', space=smem, size = 0x4, offset = 0x4, fixed_abs, tag = 'smem constant byte address 0x4 - core index']
  #allocation1 [shape = 'u32[144,128]{1,0:T(1,128)}', space=vmem, size = 0x12000, scoped, tag = 'internal scratch']
  %s0 = inlined_call_operand.vmem [shape: f32[8,4], index: 0, kind: input, shape index: {}]
  %s1 = inlined_call_operand.vmem [shape: f32[4,512], index: 1, kind: input, shape index: {}]
  %s2 = inlined_call_operand.vmem [shape: f32[8,4,512], index: 2, kind: input, shape index: {}]
  %s3 = inlined_call_operand.vmem [shape: f32[32,4], index: 3, kind: input, shape index: {}]
  %s4 = inlined_call_operand.vmem [shape: f32[32,1], index: 4, kind: input, shape index: {}]
  %s5 = inlined_call_operand.vmem [shape: f32[4,32], index: 5, kind: input, shape index: {}]
  %s6 = inlined_call_operand.vmem [shape: f32[4,1], index: 6, kind: input, shape index: {}]
  %s7 = inlined_call_operand.vmem [shape: f32[4,512], index: 7, kind: output, shape index: {}]
  %s8 = sld [smem:[#allocation0]]
  $region69: #{fwd.1} parent=0
    _
  %s10 = ssub.s32 1, %s8
  %s11 = scalar_select 0, %s10, %s8
  $region1: #{fwd.1} parent=0
    #allocation2 [shape = 'u8[4096]{0}', space=smem, size = 0x1000, scoped, tag = 'input window, operand 0, single buffered']
    #allocation3 [shape = 's32[2]{0}', space=sflag, size = 0x8, scoped, tag = 'scoped memory for fwd.1']
    %12 = vsyncpa [#allocation3], 0
    loop: start=0, step=1, limit=18
    $region2: #{fwd.1} parent=1 // loop_pre_header
      _
    $region3: #{fwd.1} parent=1 // loop_header
      %s14 = sphi 0, %s18
      %p15 = scmp.ge.s32.totalorder %s14, 18
      %s21 = sphi 0, %s33
      %s22 = sphi 0, %s29
      %s23 = sphi 0, %s21
      %s24 = sphi 0, %s22
      %s25 = sphi 0, %s23
      %s26 = sphi 0, %s24
      %s34 = sphi 0, %s34
      %s36 = sphi 0, %s34
      %s37 = sphi 0, %s36
      %s51 = sphi 0, %s37
      %s57 = sphi 0, %s59
      %s60 = sphi 0, %s57
      %s61 = sphi 0, %s60
      %s77 = sphi 0, %s61
      %s85 = sphi 0, %s87
      %s88 = sphi 0, %s85
      %s89 = sphi 0, %s88
      %s105 = sphi 0, %s89
      %s109 = sphi 0, %s109
      %s111 = sphi 0, %s109
      %s112 = sphi 0, %s111
      %s126 = sphi 0, %s112
      %s130 = sphi 0, %s130
      %s132 = sphi 0, %s130
      %s133 = sphi 0, %s132
      %s147 = sphi 0, %s133
      %s151 = sphi 0, %s151
      %s153 = sphi 0, %s151
      %s154 = sphi 0, %s153
      %s168 = sphi 0, %s154
      %s172 = sphi 0, %s172
      %s174 = sphi 0, %s172
      %s175 = sphi 0, %s174
      %s189 = sphi 0, %s175
      %s195 = sphi 0, %s197
      %s198 = sphi 0, %s195
      %s199 = sphi 0, %s198
      %s215 = sphi 0, %s199
    $region4: #{fwd.1} parent=1 // loop_header_branch
      %17 = sbr.rel (%p15) target = $region8
    $region5: #{fwd.1} parent=1 // loop_body
      %s19 = ssub.s32 %s14, 1
      %s20 = ssub.s32 %s14, 2
      %s27 = sadd.s32 1, %s22
      %p28 = scmp.ge.s32.totalorder %s27, 8
      %s29 = scalar_select %p28, 0, %s27
      %s30 = sadd.s32 1, %s21
      %s31 = scalar_select %p28, %s30, %s21
      %p32 = scmp.ge.s32.totalorder %s31, 2
      %s33 = scalar_select %p32, 0, %s31
      %s35 = sadd.s32 %s34, 1
      %p38 = scmp.eq.s32.totalorder %s14, 15
      %p39 = scmp.ne.s32.totalorder %s34, %s36
      %p40 = scmp.eq.s32.totalorder %s14, 0
      %p41 = por %p39, %p40
      %p42 = scmp.ne.s32.totalorder %s34, %s36
      %p43 = scmp.eq.s32.totalorder %s19, 15
      %p44 = por %p42, %p43
      %p45 = scmp.ne.s32.totalorder %s36, %s37
      %p46 = scmp.eq.s32.totalorder %s19, 0
      %p47 = por %p45, %p46
      %p48 = scmp.ne.s32.totalorder %s36, %s37
      %p49 = scmp.eq.s32.totalorder %s20, 15
      %p50 = por %p48, %p49
      %p52 = scmp.ne.s32.totalorder %s37, %s51
      %p53 = scmp.eq.s32.totalorder %s20, 0
      %p54 = por %p52, %p53
      %s55 = ssub.s32 %s21, %s33
      %p56 = scmp.eq.s32.totalorder %s55, 0
      %s58 = sadd.s32 %s57, 1
      %s59 = scalar_select %p56, %s57, %s58
      %p62 = pneg %p56
      %p63 = scmp.eq.s32.totalorder %s14, 15
      %p64 = por %p62, %p63
      %p65 = scmp.ne.s32.totalorder %s57, %s60
      %p66 = scmp.eq.s32.totalorder %s14, 0
      %p67 = por %p65, %p66
      %p68 = scmp.ne.s32.totalorder %s57, %s60
      %p69 = scmp.eq.s32.totalorder %s19, 15
      %p70 = por %p68, %p69
      %p71 = scmp.ne.s32.totalorder %s60, %s61
      %p72 = scmp.eq.s32.totalorder %s19, 0
      %p73 = por %p71, %p72
      %p74 = scmp.ne.s32.totalorder %s60, %s61
      %p75 = scmp.eq.s32.totalorder %s20, 15
      %p76 = por %p74, %p75
      %p78 = scmp.ne.s32.totalorder %s61, %s77
      %p79 = scmp.eq.s32.totalorder %s20, 0
      %p80 = por %p78, %p79
      %s81 = ssub.s32 %s22, %s29
      %s82 = ssub.s32 %s21, %s33
      %s83 = sor.u32 %s81, %s82
      %p84 = scmp.eq.s32.totalorder %s83, 0
      %s86 = sadd.s32 %s85, 1
      %s87 = scalar_select %p84, %s85, %s86
      %p90 = pneg %p84
      %p91 = scmp.eq.s32.totalorder %s14, 15
      %p92 = por %p90, %p91
      %p93 = scmp.ne.s32.totalorder %s85, %s88
      %p94 = scmp.eq.s32.totalorder %s14, 0
      %p95 = por %p93, %p94
      %p96 = scmp.ne.s32.totalorder %s85, %s88
      %p97 = scmp.eq.s32.totalorder %s19, 15
      %p98 = por %p96, %p97
      %p99 = scmp.ne.s32.totalorder %s88, %s89
      %p100 = scmp.eq.s32.totalorder %s19, 0
      %p101 = por %p99, %p100
      %p102 = scmp.ne.s32.totalorder %s88, %s89
      %p103 = scmp.eq.s32.totalorder %s20, 15
      %p104 = por %p102, %p103
      %p106 = scmp.ne.s32.totalorder %s89, %s105
      %p107 = scmp.eq.s32.totalorder %s20, 0
      %p108 = por %p106, %p107
      %s110 = sadd.s32 %s109, 1
      %p113 = scmp.eq.s32.totalorder %s14, 15
      %p114 = scmp.ne.s32.totalorder %s109, %s111
      %p115 = scmp.eq.s32.totalorder %s14, 0
      %p116 = por %p114, %p115
      %p117 = scmp.ne.s32.totalorder %s109, %s111
      %p118 = scmp.eq.s32.totalorder %s19, 15
      %p119 = por %p117, %p118
      %p120 = scmp.ne.s32.totalorder %s111, %s112
      %p121 = scmp.eq.s32.totalorder %s19, 0
      %p122 = por %p120, %p121
      %p123 = scmp.ne.s32.totalorder %s111, %s112
      %p124 = scmp.eq.s32.totalorder %s20, 15
      %p125 = por %p123, %p124
      %p127 = scmp.ne.s32.totalorder %s112, %s126
      %p128 = scmp.eq.s32.totalorder %s20, 0
      %p129 = por %p127, %p128
      %s131 = sadd.s32 %s130, 1
      %p134 = scmp.eq.s32.totalorder %s14, 15
      %p135 = scmp.ne.s32.totalorder %s130, %s132
      %p136 = scmp.eq.s32.totalorder %s14, 0
      %p137 = por %p135, %p136
      %p138 = scmp.ne.s32.totalorder %s130, %s132
      %p139 = scmp.eq.s32.totalorder %s19, 15
      %p140 = por %p138, %p139
      %p141 = scmp.ne.s32.totalorder %s132, %s133
      %p142 = scmp.eq.s32.totalorder %s19, 0
      %p143 = por %p141, %p142
      %p144 = scmp.ne.s32.totalorder %s132, %s133
      %p145 = scmp.eq.s32.totalorder %s20, 15
      %p146 = por %p144, %p145
      %p148 = scmp.ne.s32.totalorder %s133, %s147
      %p149 = scmp.eq.s32.totalorder %s20, 0
      %p150 = por %p148, %p149
      %s152 = sadd.s32 %s151, 1
      %p155 = scmp.eq.s32.totalorder %s14, 15
      %p156 = scmp.ne.s32.totalorder %s151, %s153
      %p157 = scmp.eq.s32.totalorder %s14, 0
      %p158 = por %p156, %p157
      %p159 = scmp.ne.s32.totalorder %s151, %s153
      %p160 = scmp.eq.s32.totalorder %s19, 15
      %p161 = por %p159, %p160
      %p162 = scmp.ne.s32.totalorder %s153, %s154
      %p163 = scmp.eq.s32.totalorder %s19, 0
      %p164 = por %p162, %p163
      %p165 = scmp.ne.s32.totalorder %s153, %s154
      %p166 = scmp.eq.s32.totalorder %s20, 15
      %p167 = por %p165, %p166
      %p169 = scmp.ne.s32.totalorder %s154, %s168
      %p170 = scmp.eq.s32.totalorder %s20, 0
      %p171 = por %p169, %p170
      %s173 = sadd.s32 %s172, 1
      %p176 = scmp.eq.s32.totalorder %s14, 15
      %p177 = scmp.ne.s32.totalorder %s172, %s174
      %p178 = scmp.eq.s32.totalorder %s14, 0
      %p179 = por %p177, %p178
      %p180 = scmp.ne.s32.totalorder %s172, %s174
      %p181 = scmp.eq.s32.totalorder %s19, 15
      %p182 = por %p180, %p181
      %p183 = scmp.ne.s32.totalorder %s174, %s175
      %p184 = scmp.eq.s32.totalorder %s19, 0
      %p185 = por %p183, %p184
      %p186 = scmp.ne.s32.totalorder %s174, %s175
      %p187 = scmp.eq.s32.totalorder %s20, 15
      %p188 = por %p186, %p187
      %p190 = scmp.ne.s32.totalorder %s175, %s189
      %p191 = scmp.eq.s32.totalorder %s20, 0
      %p192 = por %p190, %p191
      %s193 = ssub.s32 %s21, %s33
      %p194 = scmp.eq.s32.totalorder %s193, 0
      %s196 = sadd.s32 %s195, 1
      %s197 = scalar_select %p194, %s195, %s196
      %p200 = pneg %p194
      %p201 = scmp.eq.s32.totalorder %s14, 15
      %p202 = por %p200, %p201
      %p203 = scmp.ne.s32.totalorder %s195, %s198
      %p204 = scmp.eq.s32.totalorder %s14, 0
      %p205 = por %p203, %p204
      %p206 = scmp.ne.s32.totalorder %s195, %s198
      %p207 = scmp.eq.s32.totalorder %s19, 15
      %p208 = por %p206, %p207
      %p209 = scmp.ne.s32.totalorder %s198, %s199
      %p210 = scmp.eq.s32.totalorder %s19, 0
      %p211 = por %p209, %p210
      %p212 = scmp.ne.s32.totalorder %s198, %s199
      %p213 = scmp.eq.s32.totalorder %s20, 15
      %p214 = por %p212, %p213
      %p216 = scmp.ne.s32.totalorder %s199, %s215
      %p217 = scmp.eq.s32.totalorder %s20, 0
      %p218 = por %p216, %p217
      %p219 = scmp.le.s32.totalorder 1, %s14
      %p220 = scmp.lt.s32.totalorder %s14, 17
      %p221 = pnand %p219, %p220
      %p222 = pneg %p221
      // Predicated region
      $region9: #{fwd.1} parent=5 // pred_check
        _
      $region10: #{fwd.1} parent=5 // pred_check_branch
        %224 = sbr.rel (%p221) target = $region12
      $region11: #{fwd.1} parent=5 // pred_region
        %s225 = ssub.s32 %s14, 1
        // Predicated region
        $region13: #{fwd.1} parent=11 // pred_check
          %p226 = pneg %p47
        $region14: #{fwd.1} parent=11 // pred_check_branch
          %228 = sbr.rel (%p226) target = $region16
        $region15: #{fwd.1} parent=11 // pred_region
          %s230 = ssub.s32 128, 128
          %231 = vsyncadd [#allocation3], %s230
          %s233 = sshll.u32 %s0, 4
          %s234 = int_to_ptr.vmem [resolvable:$true] %s233
          %236 = dma.vmem_to_smem %s234, 128, [#allocation2], [#allocation3]
        $region16: #{fwd.1} parent=11 // pred_fallthru
          _
        // Predicated region
        $region17: #{fwd.1} parent=11 // pred_check
          %p237 = pneg %p122
        $region18: #{fwd.1} parent=11 // pred_check_branch
          %239 = sbr.rel (%p237) target = $region20
        $region19: #{fwd.1} parent=11 // pred_region
          _
        $region20: #{fwd.1} parent=11 // pred_fallthru
          _
        // Predicated region
        $region21: #{fwd.1} parent=11 // pred_check
          %p240 = pneg %p143
        $region22: #{fwd.1} parent=11 // pred_check_branch
          %242 = sbr.rel (%p240) target = $region24
        $region23: #{fwd.1} parent=11 // pred_region
          _
        $region24: #{fwd.1} parent=11 // pred_fallthru
          _
        // Predicated region
        $region25: #{fwd.1} parent=11 // pred_check
          %p243 = pneg %p164
        $region26: #{fwd.1} parent=11 // pred_check_branch
          %245 = sbr.rel (%p243) target = $region28
        $region27: #{fwd.1} parent=11 // pred_region
          _
        $region28: #{fwd.1} parent=11 // pred_fallthru
          _
        // Predicated region
        $region29: #{fwd.1} parent=11 // pred_check
          %p246 = pneg %p185
        $region30: #{fwd.1} parent=11 // pred_check_branch
          %248 = sbr.rel (%p246) target = $region32
        $region31: #{fwd.1} parent=11 // pred_region
          _
        $region32: #{fwd.1} parent=11 // pred_fallthru
          _
      $region12: #{fwd.1} parent=5 // pred_fallthru
        _
      %p249 = scmp.lt.s32.totalorder %s14, 16
      // Predicated region
      $region33: #{fwd.1} parent=5 // pred_check
        %p250 = pneg %p249
      $region34: #{fwd.1} parent=5 // pred_check_branch
        %252 = sbr.rel (%p250) target = $region36
      $region35: #{fwd.1} parent=5 // pred_region
        // Predicated region
        $region37: #{fwd.1} parent=35 // pred_check
          %p253 = pneg %p67
        $region38: #{fwd.1} parent=35 // pred_check_branch
          %255 = sbr.rel (%p253) target = $region40
        $region39: #{fwd.1} parent=35 // pred_region
          %s256 = smul.u32 2, %s21
          %p257 = scmp.lt.s32.totalorder %s256, 3
          %s258 = scalar_select %p257, %s256, 3
          %s259 = smul.addr %s258, 4
          %s260 = scalar_lea.vmem %s1, %s259
          %s261 = smul.u32 2, %s21
        $region40: #{fwd.1} parent=35 // pred_fallthru
          _
        // Predicated region
        $region41: #{fwd.1} parent=35 // pred_check
          %p262 = pneg %p95
        $region42: #{fwd.1} parent=35 // pred_check_branch
          %264 = sbr.rel (%p262) target = $region44
        $region43: #{fwd.1} parent=35 // pred_region
          %s265 = smul.u32 2, %s21
          %p266 = scmp.lt.s32.totalorder %s22, 7
          %s267 = scalar_select %p266, %s22, 7
          %p268 = scmp.lt.s32.totalorder %s265, 3
          %s269 = scalar_select %p268, %s265, 3
          %s270 = smul.addr %s267, 4
          %s271 = sadd.s32 %s269, %s270
          %s272 = smul.addr %s271, 4
          %s273 = scalar_lea.vmem %s2, %s272
          %s274 = smul.u32 2, %s21
        $region44: #{fwd.1} parent=35 // pred_fallthru
          _
      $region36: #{fwd.1} parent=5 // pred_fallthru
        _
      %p275 = scmp.le.s32.totalorder 1, %s14
      %p276 = scmp.lt.s32.totalorder %s14, 17
      %p277 = pnand %p275, %p276
      %p278 = pneg %p277
      // Predicated region
      $region45: #{fwd.1} parent=5 // pred_check
        _
      $region46: #{fwd.1} parent=5 // pred_check_branch
        %280 = sbr.rel (%p277) target = $region48
      $region47: #{fwd.1} parent=5 // pred_region
        %s281 = ssub.s32 %s14, 1
        // Predicated region
        $region49: #{fwd.1} parent=47 // pred_check
          %p282 = pneg %p47
        $region50: #{fwd.1} parent=47 // pred_check_branch
          %284 = sbr.rel (%p282) target = $region52
        $region51: #{fwd.1} parent=47 // pred_region
          %285 = dma.done [#allocation3], 128
        $region52: #{fwd.1} parent=47 // pred_fallthru
          _
        %286 = sfence
        %p287 = pneg %p47
        %p288 = pneg %p44
        %s289 = smul.u32 2, %s23
        %p290 = scmp.lt.s32.totalorder %s289, 3
        %s291 = scalar_select %p290, %s289, 3
        %s292 = smul.addr %s291, 4
        %s293 = scalar_lea.vmem %s1, %s292
        %p294 = pneg %p73
        %p295 = pneg %p70
        %s296 = smul.u32 2, %s23
        %p297 = scmp.lt.s32.totalorder %s24, 7
        %s298 = scalar_select %p297, %s24, 7
        %p299 = scmp.lt.s32.totalorder %s296, 3
        %s300 = scalar_select %p299, %s296, 3
        %s301 = smul.addr %s298, 4
        %s302 = sadd.s32 %s300, %s301
        %s303 = smul.addr %s302, 4
        %s304 = scalar_lea.vmem %s2, %s303
        %p305 = pneg %p101
        %p306 = pneg %p98
        %p307 = pneg %p122
        %p308 = pneg %p119
        %p309 = pneg %p143
        %p310 = pneg %p140
        %p311 = pneg %p164
        %p312 = pneg %p161
        %p313 = pneg %p185
        %p314 = pneg %p182
        %p315 = pneg %p211
        %p316 = pneg %p208
        %s317 = smul.u32 2, %s23
        %p318 = scmp.lt.s32.totalorder %s317, 3
        %s319 = scalar_select %p318, %s317, 3
        %s320 = smul.addr %s319, 4
        %s321 = scalar_lea.vmem %s7, %s320
        %s322 = smul.u32 2, %s23
        %p323 = scmp.lt.s32.totalorder %s322, 3
        %s324 = scalar_select %p323, %s322, 3
        %s325 = smul.addr %s324, 4
        %s326 = scalar_lea.vmem %s1, %s325
        %s327 = smul.u32 2, %s23
        %s328 = smul.u32 2, %s23
        %p329 = scmp.lt.s32.totalorder %s24, 7
        %s330 = scalar_select %p329, %s24, 7
        %p331 = scmp.lt.s32.totalorder %s328, 3
        %s332 = scalar_select %p331, %s328, 3
        %s333 = smul.addr %s330, 4
        %s334 = sadd.s32 %s332, %s333
        %s335 = smul.addr %s334, 4
        %s336 = scalar_lea.vmem %s2, %s335
        %s337 = smul.u32 2, %s23
        %s338 = smul.u32 2, %s23
        %p339 = scmp.lt.s32.totalorder %s338, 3
        %s340 = scalar_select %p339, %s338, 3
        %s341 = smul.addr %s340, 4
        %s342 = scalar_lea.vmem %s7, %s341
        %s343 = smul.u32 2, %s23
        %p344 = scmp.eq.s32.totalorder %s24, 0
        // Predicated region
        $region53: #{fwd.1} parent=47 // pred_check
          %p345 = pneg %p344
        $region54: #{fwd.1} parent=47 // pred_check_branch
          %347 = sbr.rel (%p345) target = $region56
        $region55: #{fwd.1} parent=47 // pred_region
          %v348 = vld [vmem:[%s326] sm:$0xff]
          %349 = vst [vmem:[%s342] sm:$0xff] %v348
        $region56: #{fwd.1} parent=47 // pred_fallthru
          _
        %v350 = vld [vmem:[%s342] sm:$0xff]
        %v351 = vld [vmem:[%s3] sm:$0xff]
        %v352 = vld [vmem:[%s3 + $0x8] sm:$0xff]
        %v353 = vld [vmem:[%s3 + $0x10] sm:$0xff]
        %v354 = vld [vmem:[%s3 + $0x18] sm:$0xff]
        %v355 = vld [vmem:[%s4] sm:$0xff]
        %v356 = vld [vmem:[%s4 + $0x8] sm:$0xff]
        %v357 = vld [vmem:[%s4 + $0x10] sm:$0xff]
        %v358 = vld [vmem:[%s4 + $0x18] sm:$0xff]
        %360 = vset.pattern.permute.xlu0 0
        %361 = vperm.xlu0 %360, %v355
        %v362 = vpop.permute.xlu0 %361
        %365 = vset.pattern.permute.xlu0 0
        %366 = vperm.xlu0 %365, %v356
        %v367 = vpop.permute.xlu0 %366
        %370 = vset.pattern.permute.xlu0 0
        %371 = vperm.xlu0 %370, %v357
        %v372 = vpop.permute.xlu0 %371
        %375 = vset.pattern.permute.xlu0 0
        %376 = vperm.xlu0 %375, %v358
        %v377 = vpop.permute.xlu0 %376
        %v380 = vcombine.high %v350, %v350
        %vm381 = vcmask 31744
        %v383 = vsel %vm381, %v351, 0
        %v386 = vsel %vm381, %v352, 0
        %v389 = vsel %vm381, %v353, 0
        %v392 = vsel %vm381, %v354, 0
        %vm394 = vcmask 1043456
        %v395 = vsel %vm394, %v350, 0
        %v397 = vsel %vm394, %v380, 0
        %399 = vmatprep.subr.mxu0 0.0
        %400 = vmatpush1.msra.mxu0 0.0
        %401 = vmatprep.subr.mxu0 0.0
        %402 = vmatpush1.msra.mxu0 0.0
        %403 = vmatprep.subr.mxu0 0.0
        %404 = vmatpush1.msra.mxu0 0.0
        %405 = vmatprep.subr.mxu0 0.0
        %406 = vmatpush1.msra.mxu0 0.0
        %407 = vmatprep.subr.mxu0 0.0
        %408 = vmatpush1.msra.mxu0 0.0
        %409 = vmatprep.subr.mxu0 0.0
        %410 = vmatpush1.msra.mxu0 0.0
        %411 = vmatprep.subr.mxu0 0.0
        %412 = vmatpush1.msra.mxu0 0.0
        %413 = vmatprep.subr.mxu0 0.0
        %414 = vmatpush1.msra.mxu0 0.0
        %415 = vmatprep.subr.mxu0 0.0
        %416 = vmatpush1.msra.mxu0 0.0
        %417 = vmatprep.subr.mxu0 0.0
        %418 = vmatpush1.msra.mxu0 0.0
        %419 = vmatprep.subr.mxu0 0.0
        %420 = vmatpush1.msra.mxu0 0.0
        %421 = vmatprep.subr.mxu0 0.0
        %422 = vmatpush1.msra.mxu0 0.0
        %423 = vmatprep.subr.mxu0 0.0
        %424 = vmatpush1.msra.mxu0 0.0
        %425 = vmatprep.subr.mxu0 0.0
        %426 = vmatpush1.msra.mxu0 0.0
        %427 = vmatprep.subr.mxu0 0.0
        %428 = vmatpush1.msra.mxu0 0.0
        %429 = vmatprep.subr.mxu0 %v397
        %430 = vmatpush1.msra.mxu0 %v395
        %431 = vmatprep.subr.mxu0 0.0
        %432 = vmatpush2.msra.mxu0 0.0
        %433 = vmatprep.subr.mxu0 0.0
        %434 = vmatpush2.msra.mxu0 0.0
        %435 = vmatprep.subr.mxu0 0.0
        %436 = vmatpush2.msra.mxu0 0.0
        %437 = vmatprep.subr.mxu0 0.0
        %438 = vmatpush2.msra.mxu0 0.0
        %439 = vmatprep.subr.mxu0 0.0
        %440 = vmatpush2.msra.mxu0 0.0
        %441 = vmatprep.subr.mxu0 0.0
        %442 = vmatpush2.msra.mxu0 0.0
        %443 = vmatprep.subr.mxu0 0.0
        %444 = vmatpush2.msra.mxu0 0.0
        %445 = vmatprep.subr.mxu0 0.0
        %446 = vmatpush2.msra.mxu0 0.0
        %447 = vmatprep.subr.mxu0 0.0
        %448 = vmatpush2.msra.mxu0 0.0
        %449 = vmatprep.subr.mxu0 0.0
        %450 = vmatpush2.msra.mxu0 0.0
        %451 = vmatprep.subr.mxu0 0.0
        %452 = vmatpush2.msra.mxu0 0.0
        %453 = vmatprep.subr.mxu0 0.0
        %454 = vmatpush2.msra.mxu0 0.0
        %455 = vmatprep.subr.mxu0 0.0
        %456 = vmatpush2.msra.mxu0 0.0
        %457 = vmatprep.subr.mxu0 0.0
        %458 = vmatpush2.msra.mxu0 0.0
        %459 = vmatprep.subr.mxu0 0.0
        %460 = vmatpush2.msra.mxu0 0.0
        %461 = vmatprep.subr.mxu0 0.0
        %462 = vmatpush2.msra.mxu0 0.0
        %463 = vmatprep.mubr.f32.mxu0 0.0
        %464 = vmatmul.mubr.f32.gmra.mxu0 %v383
        %v465 = vpop.f32.mrf.mxu0
        %v466 = vadd.f32 %v362, %v465
        %v467 = vpop.f32.mrf.mxu0
        %v468 = vadd.f32 %v362, %v467
        %469 = vmatprep.mubr.f32.mxu0 0.0
        %470 = vmatmul.mubr.f32.gmra.mxu0 %v386
        %v471 = vpop.f32.mrf.mxu0
        %v472 = vadd.f32 %v367, %v471
        %v473 = vpop.f32.mrf.mxu0
        %v474 = vadd.f32 %v367, %v473
        %475 = vmatprep.mubr.f32.mxu0 0.0
        %476 = vmatmul.mubr.f32.gmra.mxu0 %v389
        %v477 = vpop.f32.mrf.mxu0
        %v478 = vadd.f32 %v372, %v477
        %v479 = vpop.f32.mrf.mxu0
        %v480 = vadd.f32 %v372, %v479
        %481 = vmatprep.mubr.f32.mxu0 0.0
        %482 = vmatmul.mubr.f32.gmra.mxu0 %v392
        %v483 = vpop.f32.mrf.mxu0
        %v484 = vadd.f32 %v377, %v483
        %v485 = vpop.f32.mrf.mxu0
        %v486 = vadd.f32 %v377, %v485
        %487 = vdwg.mxu0
        %v488 = vtanh.pop %v466
        %v489 = vtanh.pop %v468
        %v490 = vtanh.pop %v472
        %v491 = vtanh.pop %v474
        %v492 = vtanh.pop %v478
        %v493 = vtanh.pop %v480
        %v494 = vtanh.pop %v484
        %v495 = vtanh.pop %v486
        %v496 = vld [vmem:[%s5] sm:$0xf]
        %v497 = vld [vmem:[%s6] sm:$0xf]
        %499 = vset.pattern.permute.xlu0 0
        %500 = vperm.xlu0 %499, %v497
        %v501 = vpop.permute.xlu0 %500
        %vm503 = vcmask 261120
        %v505 = vsel %vm503, %v496, 0
        %507 = vmatprep.subr.mxu0 0.0
        %508 = vmatpush1.msra.mxu0 0.0
        %509 = vmatprep.subr.mxu0 0.0
        %510 = vmatpush1.msra.mxu0 0.0
        %511 = vmatprep.subr.mxu0 0.0
        %512 = vmatpush1.msra.mxu0 0.0
        %513 = vmatprep.subr.mxu0 0.0
        %514 = vmatpush1.msra.mxu0 0.0
        %515 = vmatprep.subr.mxu0 0.0
        %516 = vmatpush1.msra.mxu0 0.0
        %517 = vmatprep.subr.mxu0 0.0
        %518 = vmatpush1.msra.mxu0 0.0
        %519 = vmatprep.subr.mxu0 0.0
        %520 = vmatpush1.msra.mxu0 0.0
        %521 = vmatprep.subr.mxu0 0.0
        %522 = vmatpush1.msra.mxu0 0.0
        %523 = vmatprep.subr.mxu0 0.0
        %524 = vmatpush1.msra.mxu0 0.0
        %525 = vmatprep.subr.mxu0 0.0
        %526 = vmatpush1.msra.mxu0 0.0
        %527 = vmatprep.subr.mxu0 0.0
        %528 = vmatpush1.msra.mxu0 0.0
        %529 = vmatprep.subr.mxu0 0.0
        %530 = vmatpush1.msra.mxu0 0.0
        %531 = vmatprep.subr.mxu0 %v495
        %532 = vmatpush1.msra.mxu0 %v494
        %533 = vmatprep.subr.mxu0 %v493
        %534 = vmatpush1.msra.mxu0 %v492
        %535 = vmatprep.subr.mxu0 %v491
        %536 = vmatpush1.msra.mxu0 %v490
        %537 = vmatprep.subr.mxu0 %v489
        %538 = vmatpush1.msra.mxu0 %v488
        %539 = vmatprep.subr.mxu0 0.0
        %540 = vmatpush2.msra.mxu0 0.0
        %541 = vmatprep.subr.mxu0 0.0
        %542 = vmatpush2.msra.mxu0 0.0
        %543 = vmatprep.subr.mxu0 0.0
        %544 = vmatpush2.msra.mxu0 0.0
        %545 = vmatprep.subr.mxu0 0.0
        %546 = vmatpush2.msra.mxu0 0.0
        %547 = vmatprep.subr.mxu0 0.0
        %548 = vmatpush2.msra.mxu0 0.0
        %549 = vmatprep.subr.mxu0 0.0
        %550 = vmatpush2.msra.mxu0 0.0
        %551 = vmatprep.subr.mxu0 0.0
        %552 = vmatpush2.msra.mxu0 0.0
        %553 = vmatprep.subr.mxu0 0.0
        %554 = vmatpush2.msra.mxu0 0.0
        %555 = vmatprep.subr.mxu0 0.0
        %556 = vmatpush2.msra.mxu0 0.0
        %557 = vmatprep.subr.mxu0 0.0
        %558 = vmatpush2.msra.mxu0 0.0
        %559 = vmatprep.subr.mxu0 0.0
        %560 = vmatpush2.msra.mxu0 0.0
        %561 = vmatprep.subr.mxu0 0.0
        %562 = vmatpush2.msra.mxu0 0.0
        %563 = vmatprep.subr.mxu0 0.0
        %564 = vmatpush2.msra.mxu0 0.0
        %565 = vmatprep.subr.mxu0 0.0
        %566 = vmatpush2.msra.mxu0 0.0
        %567 = vmatprep.subr.mxu0 0.0
        %568 = vmatpush2.msra.mxu0 0.0
        %569 = vmatprep.subr.mxu0 0.0
        %570 = vmatpush2.msra.mxu0 0.0
        %571 = vmatprep.mubr.f32.mxu0 0.0
        %572 = vmatmul.mubr.f32.gmra.mxu0 %v505
        %v573 = vpop.f32.mrf.mxu0
        %v574 = vadd.f32 %v501, %v573
        %v575 = vpop.f32.mrf.mxu0
        %v576 = vadd.f32 %v501, %v575
        %577 = vdwg.mxu0
        %s578 = smul.u32 %s24, 128
        %s579 = sld [smem:[#allocation2 + %s578]]
        %s580 = sadd.s32 %s578, 1
        %s581 = sld [smem:[#allocation2 + %s580]]
        %s582 = sadd.s32 %s578, 2
        %s583 = sld [smem:[#allocation2 + %s582]]
        %v584 = vstv %s581
        %v585 = vmul.f32 %v574, %v584
        %v586 = vmul.f32 %v576, %v584
        %v589 = vcombine.low %v585, %v586
        %v591 = vsub.f32 %v350, %v589
        %v592 = vstv %s579
        %v593 = vmul.f32 %v592, %v591
        %v594 = vld [vmem:[%s336] sm:$0xff]
        %v595 = vstv %s583
        %v596 = vmul.f32 %v595, %v594
        %v597 = vadd.f32 %v593, %v596
        %598 = vst [vmem:[%s342] sm:$0xff] %v597
        %s599 = smul.u32 2, %s23
        %p600 = scmp.lt.s32.totalorder %s599, 3
        %s601 = scalar_select %p600, %s599, 3
        %s602 = smul.addr %s601, 4
        %s603 = scalar_lea.vmem %s7, %s602
        // Predicated region
        $region57: #{fwd.1} parent=47 // pred_check
          %p604 = pneg %p208
        $region58: #{fwd.1} parent=47 // pred_check_branch
          %606 = sbr.rel (%p604) target = $region60
        $region59: #{fwd.1} parent=47 // pred_region
          %s607 = smul.u32 2, %s23
        $region60: #{fwd.1} parent=47 // pred_fallthru
          _
      $region48: #{fwd.1} parent=5 // pred_fallthru
        _
      %p608 = scmp.le.s32.totalorder 2, %s14
      // Predicated region
      $region61: #{fwd.1} parent=5 // pred_check
        %p609 = pneg %p608
      $region62: #{fwd.1} parent=5 // pred_check_branch
        %611 = sbr.rel (%p609) target = $region64
      $region63: #{fwd.1} parent=5 // pred_region
        %s612 = ssub.s32 %s14, 2
        // Predicated region
        $region65: #{fwd.1} parent=63 // pred_check
          %p613 = pneg %p214
        $region66: #{fwd.1} parent=63 // pred_check_branch
          %615 = sbr.rel (%p613) target = $region68
        $region67: #{fwd.1} parent=63 // pred_region
          %s616 = smul.u32 2, %s25
          %p617 = scmp.lt.s32.totalorder %s616, 3
          %s618 = scalar_select %p617, %s616, 3
          %s619 = smul.addr %s618, 4
          %s620 = scalar_lea.vmem %s7, %s619
        $region68: #{fwd.1} parent=63 // pred_fallthru
          _
      $region64: #{fwd.1} parent=5 // pred_fallthru
        _
    $region6: #{fwd.1} parent=1 // loop_footer
      %s18 = sadd.s32 1, %s14
    $region7: #{fwd.1} parent=1 // loop_footer_branch
      %13 = sbr.rel target = $region3
    $region8: #{fwd.1} parent=1 // loop_exit
      _
    %621 = vsyncpa [#allocation3], 1
    %s622 = scalar_lea.sflag [#allocation3], 1
    %623 = vsyncpa %s622, 1

</llo_original>
